<compile_context>
chip_gen: v6e
topology: v6e:2x2x1
jax: 0.10.0
libtpu: 0.0.40
codegen_flags: <defaults>
</compile_context>

<pallas_src>
import functools

import numpy as np
import jax
import jax.numpy as jnp
from jax.experimental import pallas as pl
from jax.experimental.pallas import tpu as pltpu

WIN = 11          # window size
SIGMA = 1.5       # gaussian sigma
K1, K2 = 0.01, 0.03
DATA_RANGE = 1.0
C1 = (K1 * DATA_RANGE) ** 2
C2 = (K2 * DATA_RANGE) ** 2


def _round_up(a, m):
    return ((a + m - 1) // m) * m


def _gauss_1d():
    # matches pytorch_msssim._fspecial_gauss_1d
    coords = np.arange(WIN, dtype=np.float64) - WIN // 2
    g = np.exp(-(coords ** 2) / (2.0 * SIGMA ** 2))
    g /= g.sum()
    return g.astype(np.float32)


def _build_filters(H, W, P, batched_h):
    """Band matrices implementing the valid separable Gaussian blur as matmuls.

    gw: (P*W, Wo_pad) block-structured so P lane-packed images never mix;
        columns >= P*Wo are zero (lane padding).
    gh: either (Ho_pad, H), or block-diagonal I_5 (x) gh of shape
        (5*Ho_pad, 5*H) so the vertical pass over the 5 stacked maps is one
        matmul; rows o in [Ho, Ho_pad) of every block are zero (row padding).
    """
    g = _gauss_1d()
    Ho, Wo = H - WIN + 1, W - WIN + 1
    Ho_pad = _round_up(Ho, 8)                 # sublane-aligned output rows
    Wp = P * W
    Wo_pad = _round_up(P * Wo, 128)           # lane-dense blurred width

    gw = np.zeros((Wp, Wo_pad), np.float32)
    for p in range(P):
        for j in range(Wo):
            gw[p * W + j: p * W + j + WIN, p * Wo + j] = g

    if batched_h:
        gh = np.zeros((5 * Ho_pad, 5 * H), np.float32)
        for k in range(5):
            for o in range(Ho):
                gh[k * Ho_pad + o, k * H + o: k * H + o + WIN] = g
    else:
        gh = np.zeros((Ho_pad, H), np.float32)
        for o in range(Ho):
            gh[o, o: o + WIN] = g
    return gh, gw, Ho, Wo, Ho_pad, Wo_pad


def _vmem_capacity_bytes():
    try:
        return int(pltpu.get_tpu_info().vmem_capacity_bytes)
    except Exception:
        return 64 * 1024 * 1024               # conservative fallback (v7x per-core VMEM)


def _choose_tb(Bp, H, Wp, Wo_pad, Ho_pad, gh_size, budget_bytes):
    """Largest divisor of Bp fitting the VMEM budget, keeping >= 4 grid steps."""
    def est(tb):
        return 4 * (4 * tb * H * Wp                 # x, y blocks, double-buffered
                    + 2 * (gh_size + Wp * Wo_pad)   # band matrices (double-buffered)
                    + 5 * H * (Wp + Wo_pad)         # stacked maps + W-pass result (1 slab)
                    + 12 * Ho_pad * Wo_pad)         # blurred maps + epilogue temps (1 slab)

    min_steps = min(Bp, 4)                          # >= 2 steps per TensorCore on v7x
    tb = 1
    for cand in range(1, Bp + 1):
        if Bp % cand == 0 and Bp // cand >= min_steps and est(cand) <= budget_bytes:
            tb = cand
    return tb


def _ssim_tile_kernel(gh_ref, gw_ref, x_ref, y_ref, o_ref, *, batched_h):
    # gh_ref: (5*Ho_pad, 5*H) if batched_h else (Ho_pad, H)
    # gw_ref: (Wp, Wo_pad);  x_ref/y_ref: (TB, H, Wp);  o_ref: (1, 1, 128)
    gh = gh_ref[...]
    gw = gw_ref[...]
    tb, h, _ = x_ref.shape
    ho_pad = gh.shape[0] // 5 if batched_h else gh.shape[0]

    def slab_partial(b):
        xb = x_ref[b]                                             # (H, Wp)
        yb = y_ref[b]
        # Five maps stacked along rows -> one lane-contracting (W) pass on the MXU.
        maps = jnp.concatenate([xb, yb, xb * xb, yb * yb, xb * yb], axis=0)   # (5H, Wp)
        u = jnp.dot(maps, gw, preferred_element_type=jnp.float32)             # (5H, Wo_pad)

        if batched_h:
            # One vertical pass for all five maps via the block-diagonal gh.
            v = jnp.dot(gh, u, preferred_element_type=jnp.float32)            # (5*Ho_pad, Wo_pad)
            mu1 = v[0 * ho_pad:1 * ho_pad]
            mu2 = v[1 * ho_pad:2 * ho_pad]
            bxx = v[2 * ho_pad:3 * ho_pad]
            byy = v[3 * ho_pad:4 * ho_pad]
            bxy = v[4 * ho_pad:5 * ho_pad]
        else:
            mu1 = jnp.dot(gh, u[0 * h:1 * h], preferred_element_type=jnp.float32)
            mu2 = jnp.dot(gh, u[1 * h:2 * h], preferred_element_type=jnp.float32)
            bxx = jnp.dot(gh, u[2 * h:3 * h], preferred_element_type=jnp.float32)
            byy = jnp.dot(gh, u[3 * h:4 * h], preferred_element_type=jnp.float32)
            bxy = jnp.dot(gh, u[4 * h:5 * h], preferred_element_type=jnp.float32)

        # Re-associated epilogue: keep only mu1*mu2 and mu1^2+mu2^2 live.
        mu12 = mu1 * mu2
        musq = mu1 * mu1 + mu2 * mu2
        s12 = bxy - mu12                      # sigma12
        ssum = (bxx + byy) - musq             # sigma1^2 + sigma2^2
        num = (2.0 * mu12 + C1) * (2.0 * s12 + C2)
        den = (musq + C1) * (ssum + C2)
        # EUP estimate + one Newton step (~exact). Accumulate ssim - 1 = (num-den)/den:
        # zero-padded rows/lanes have num == den exactly, so they contribute exactly 0.
        r = pl.reciprocal(den, approx=True)
        r = r * (2.0 - den * r)
        return jnp.sum((num - den) * r, axis=(0, 1), keepdims=True)           # (1, 1)

    if tb == 1:
        total = slab_partial(0)
    else:
        total = jax.lax.fori_loop(
            0, tb, lambda b, acc: acc + slab_partial(b),
            jnp.zeros((1, 1), jnp.float32))

    o_ref[...] = jnp.broadcast_to(total[None], (1, 1, 128))


def ssim_loss(x, y):
    """x, y: (N, C, H, W) float32, values in [0, data_range]. Returns scalar loss."""
    assert x.shape == y.shape
    N, C, H, W = x.shape
    assert H >= WIN and W >= WIN, "spatial dims must be >= window size (11)"
    B = N * C

    # Lane-pack small images: P images side by side along the lane axis.
    P = 1
    if W < 128:
        for cand in range(1, max(1, 128 // W) + 1):
            if B % cand == 0:
                P = cand
    Bp, Wp = B // P, P * W

    batched_h = (5 * H) <= 256                 # block-diag gh costs no extra MXU K-passes
    gh, gw, Ho, Wo, Ho_pad, Wo_pad = _build_filters(H, W, P, batched_h)

    vmem_cap = _vmem_capacity_bytes()
    TB = _choose_tb(Bp, H, Wp, Wo_pad, Ho_pad, gh.size, int(0.4 * vmem_cap))
    G = Bp // TB

    xb = x.reshape(B, H, W).astype(jnp.float32)
    yb = y.reshape(B, H, W).astype(jnp.float32)
    if P > 1:
        xb = xb.reshape(Bp, P, H, W).transpose(0, 2, 1, 3).reshape(Bp, H, Wp)
        yb = yb.reshape(Bp, P, H, W).transpose(0, 2, 1, 3).reshape(Bp, H, Wp)
    else:
        xb = xb.reshape(Bp, H, Wp)
        yb = yb.reshape(Bp, H, Wp)

    kernel = functools.partial(_ssim_tile_kernel, batched_h=batched_h)
    partials = pl.pallas_call(
        kernel,
        out_shape=jax.ShapeDtypeStruct((G, 1, 128), jnp.float32),
        grid=(G,),
        in_specs=[
            pl.BlockSpec(gh.shape, lambda i: (0, 0)),          # vertical band matrix
            pl.BlockSpec(gw.shape, lambda i: (0, 0)),          # horizontal band matrix
            pl.BlockSpec((TB, H, Wp), lambda i: (i, 0, 0)),    # x tile
            pl.BlockSpec((TB, H, Wp), lambda i: (i, 0, 0)),    # y tile
        ],
        out_specs=pl.BlockSpec((1, 1, 128), lambda i: (i, 0, 0)),
        compiler_params=pltpu.CompilerParams(
            dimension_semantics=("parallel",),
            vmem_limit_bytes=int(0.75 * vmem_cap),
        ),
    )(jnp.asarray(gh), jnp.asarray(gw), xb, yb)

    # Kernel sums (ssim - 1) over valid elements (padded elements are exactly 0):
    #   mean_ssim = 1 + S / count  =>  loss = 1 - mean_ssim = -S / count.
    count = float(B * Ho * Wo)
    return -jnp.sum(partials[:, 0, 0]) / count


def _ref_ssim_loss_np(x, y):
    # Pure-numpy (float64) reference of the same (pytorch_msssim) semantics.
    g = _gauss_1d().astype(np.float64)
    N, C, H, W = x.shape
    B = N * C
    Ho, Wo = H - WIN + 1, W - WIN + 1
    xb = x.reshape(B, H, W).astype(np.float64)
    yb = y.reshape(B, H, W).astype(np.float64)

    def blur(m):
        t = sum(g[k] * m[:, :, k:k + Wo] for k in range(WIN))
        return sum(g[k] * t[:, k:k + Ho, :] for k in range(WIN))

    mu1, mu2 = blur(xb), blur(yb)
    s1 = blur(xb * xb) - mu1 * mu1
    s2 = blur(yb * yb) - mu2 * mu2
    s12 = blur(xb * yb) - mu1 * mu2
    cs = (2 * s12 + C2) / (s1 + s2 + C2)
    ssim_map = ((2 * mu1 * mu2 + C1) / (mu1 * mu1 + mu2 * mu2 + C1)) * cs
    return 1.0 - ssim_map.mean()


if __name__ == "__main__":
    key = jax.random.PRNGKey(0)
    kx, ky = jax.random.split(key)
    # Small shapes consistent with the module: NCHW images in [0, 1].
    x = jax.random.uniform(kx, (2, 4, 16, 16), dtype=jnp.float32)
    y = jax.random.uniform(ky, (2, 4, 16, 16), dtype=jnp.float32)

    loss_fn = jax.jit(ssim_loss)
    loss = jax.block_until_ready(loss_fn(x, y))

    ref = _ref_ssim_loss_np(np.asarray(x), np.asarray(y))
    # Tolerance leaves headroom for the MXU's reduced-precision f32 matmul passes
    # in the Gaussian blur while still catching real implementation bugs.
    np.testing.assert_allclose(float(loss), float(ref), rtol=1e-3, atol=3e-3)

    print("KERNEL_OK")
</pallas_src>

<mosaic_0001>
module attributes {stable_mosaic.version = 11 : i64} {
  func.func @_ssim_tile_kernel(%arg0: i32, %arg1: memref<40x80xf32, #tpu.memory_space<vmem>>, %arg2: memref<128x128xf32, #tpu.memory_space<vmem>>, %arg3: memref<1x16x128xf32, #tpu.memory_space<vmem>>, %arg4: memref<1x16x128xf32, #tpu.memory_space<vmem>>, %arg5: memref<1x1x128xf32, #tpu.memory_space<vmem>>) attributes {dimension_semantics = [#tpu.dimension_semantics<parallel>], iteration_bounds = array<i64: 1>, scalar_prefetch = 0 : i64, scratch_operands = 0 : i64, tpu.core_type = #tpu.core_type<tc>, window_params = [{pipeline_mode = #tpu.pipeline_mode<synchronous>, transform_indices = @transform_0, window_bounds = array<i64: 40, 80>}, {pipeline_mode = #tpu.pipeline_mode<synchronous>, transform_indices = @transform_1, window_bounds = array<i64: 128, 128>}, {transform_indices = @transform_2, window_bounds = array<i64: 1, 16, 128>}, {transform_indices = @transform_3, window_bounds = array<i64: 1, 16, 128>}, {transform_indices = @transform_4, window_bounds = array<i64: 1, 1, 128>}]} {
    %c0 = arith.constant 0 : index
    %c0_0 = arith.constant 0 : index
    %0 = vector.load %arg1[%c0, %c0_0] : memref<40x80xf32, #tpu.memory_space<vmem>>, vector<40x80xf32>
    %c0_1 = arith.constant 0 : index
    %c0_2 = arith.constant 0 : index
    %1 = vector.load %arg2[%c0_1, %c0_2] : memref<128x128xf32, #tpu.memory_space<vmem>>, vector<128x128xf32>
    %c0_3 = arith.constant 0 : index
    %c0_4 = arith.constant 0 : index
    %c0_5 = arith.constant 0 : index
    %2 = vector.load %arg3[%c0_3, %c0_4, %c0_5] : memref<1x16x128xf32, #tpu.memory_space<vmem>>, vector<1x16x128xf32>
    %3 = vector.shape_cast %2 : vector<1x16x128xf32> to vector<16x128xf32>
    %c0_6 = arith.constant 0 : index
    %c0_7 = arith.constant 0 : index
    %c0_8 = arith.constant 0 : index
    %4 = vector.load %arg4[%c0_6, %c0_7, %c0_8] : memref<1x16x128xf32, #tpu.memory_space<vmem>>, vector<1x16x128xf32>
    %5 = vector.shape_cast %4 : vector<1x16x128xf32> to vector<16x128xf32>
    %6 = arith.mulf %3, %3 : vector<16x128xf32>
    %7 = arith.mulf %5, %5 : vector<16x128xf32>
    %8 = arith.mulf %3, %5 : vector<16x128xf32>
    %9 = tpu.concatenate %3, %5, %6, %7, %8 in 0 : vector<16x128xf32>, vector<16x128xf32>, vector<16x128xf32>, vector<16x128xf32>, vector<16x128xf32> -> vector<80x128xf32>
    %cst = arith.constant dense<0.000000e+00> : vector<80x128xf32>
    %10 = tpu.matmul %9, %1, %cst {dimension_numbers = #tpu.dot_dimension_numbers<[1], [0], [0], [1], [0, 0, 1, 1], [], []>} : vector<80x128xf32>, vector<128x128xf32>, vector<80x128xf32> -> vector<80x128xf32>
    %cst_9 = arith.constant dense<0.000000e+00> : vector<40x128xf32>
    %11 = tpu.matmul %0, %10, %cst_9 {dimension_numbers = #tpu.dot_dimension_numbers<[1], [0], [0], [1], [0, 0, 1, 1], [], []>} : vector<40x80xf32>, vector<80x128xf32>, vector<40x128xf32> -> vector<40x128xf32>
    %12 = vector.extract_strided_slice %11 {offsets = [0, 0], sizes = [8, 128], strides = [1, 1]} : vector<40x128xf32> to vector<8x128xf32>
    %13 = vector.extract_strided_slice %11 {offsets = [8, 0], sizes = [8, 128], strides = [1, 1]} : vector<40x128xf32> to vector<8x128xf32>
    %14 = vector.extract_strided_slice %11 {offsets = [16, 0], sizes = [8, 128], strides = [1, 1]} : vector<40x128xf32> to vector<8x128xf32>
    %15 = vector.extract_strided_slice %11 {offsets = [24, 0], sizes = [8, 128], strides = [1, 1]} : vector<40x128xf32> to vector<8x128xf32>
    %16 = vector.extract_strided_slice %11 {offsets = [32, 0], sizes = [8, 128], strides = [1, 1]} : vector<40x128xf32> to vector<8x128xf32>
    %17 = arith.mulf %12, %13 : vector<8x128xf32>
    %18 = arith.mulf %12, %12 : vector<8x128xf32>
    %19 = arith.mulf %13, %13 : vector<8x128xf32>
    %20 = arith.addf %18, %19 : vector<8x128xf32>
    %21 = arith.subf %16, %17 : vector<8x128xf32>
    %22 = arith.addf %14, %15 : vector<8x128xf32>
    %23 = arith.subf %22, %20 : vector<8x128xf32>
    %cst_10 = arith.constant 2.000000e+00 : f32
    %24 = vector.broadcast %cst_10 : f32 to vector<8x128xf32>
    %25 = arith.mulf %24, %17 : vector<8x128xf32>
    %cst_11 = arith.constant 9.99999974E-5 : f32
    %26 = vector.broadcast %cst_11 : f32 to vector<8x128xf32>
    %27 = arith.addf %25, %26 : vector<8x128xf32>
    %cst_12 = arith.constant 2.000000e+00 : f32
    %28 = vector.broadcast %cst_12 : f32 to vector<8x128xf32>
    %29 = arith.mulf %28, %21 : vector<8x128xf32>
    %cst_13 = arith.constant 8.99999984E-4 : f32
    %30 = vector.broadcast %cst_13 : f32 to vector<8x128xf32>
    %31 = arith.addf %29, %30 : vector<8x128xf32>
    %32 = arith.mulf %27, %31 : vector<8x128xf32>
    %cst_14 = arith.constant 9.99999974E-5 : f32
    %33 = vector.broadcast %cst_14 : f32 to vector<8x128xf32>
    %34 = arith.addf %20, %33 : vector<8x128xf32>
    %cst_15 = arith.constant 8.99999984E-4 : f32
    %35 = vector.broadcast %cst_15 : f32 to vector<8x128xf32>
    %36 = arith.addf %23, %35 : vector<8x128xf32>
    %37 = arith.mulf %34, %36 : vector<8x128xf32>
    %38 = tpu.reciprocal %37 {approx = true} : vector<8x128xf32> -> vector<8x128xf32>
    %39 = arith.mulf %37, %38 : vector<8x128xf32>
    %cst_16 = arith.constant 2.000000e+00 : f32
    %40 = vector.broadcast %cst_16 : f32 to vector<8x128xf32>
    %41 = arith.subf %40, %39 : vector<8x128xf32>
    %42 = arith.mulf %38, %41 : vector<8x128xf32>
    %43 = arith.subf %32, %37 : vector<8x128xf32>
    %44 = arith.mulf %43, %42 : vector<8x128xf32>
    %45 = vector.shape_cast %44 : vector<8x128xf32> to vector<1x8x128xf32>
    %cst_17 = arith.constant dense<0.000000e+00> : vector<1xf32>
    %46 = vector.multi_reduction <add>, %45, %cst_17 [1, 2] : vector<1x8x128xf32> to vector<1xf32>
    %47 = vector.shape_cast %46 : vector<1xf32> to vector<1x1x1xf32>
    %48 = vector.extract %47[0, 0, 0] : f32 from vector<1x1x1xf32>
    %49 = vector.broadcast %48 : f32 to vector<1x1xf32>
    %50 = vector.shape_cast %49 : vector<1x1xf32> to vector<1x1x1xf32>
    %51 = vector.shape_cast %50 : vector<1x1x1xf32> to vector<1x1x1xf32>
    %52 = vector.broadcast %51 : vector<1x1x1xf32> to vector<1x1x128xf32>
    %c0_18 = arith.constant 0 : index
    %c0_19 = arith.constant 0 : index
    %c0_20 = arith.constant 0 : index
    %53 = vector.load %arg5[%c0_18, %c0_19, %c0_20] : memref<1x1x128xf32, #tpu.memory_space<vmem>>, vector<1x1x128xf32>
    tpu.vector_store %arg5[%c0_18, %c0_19, %c0_20], %52 {strides = array<i32>} : memref<1x1x128xf32, #tpu.memory_space<vmem>>, vector<1x1x128xf32>,
    return
  }
  func.func @transform_0(%arg0: i32) -> (i32, i32) {
    %c0_i32 = arith.constant 0 : i32
    %c0_i32_0 = arith.constant 0 : i32
    %c0_i32_1 = arith.constant 0 : i32
    return %c0_i32, %c0_i32_0 : i32, i32
  }
  func.func @transform_1(%arg0: i32) -> (i32, i32) {
    %c0_i32 = arith.constant 0 : i32
    %c0_i32_0 = arith.constant 0 : i32
    %c0_i32_1 = arith.constant 0 : i32
    return %c0_i32, %c0_i32_0 : i32, i32
  }
  func.func @transform_2(%arg0: i32) -> (i32, i32, i32) {
    %c0_i32 = arith.constant 0 : i32
    %c0_i32_0 = arith.constant 0 : i32
    %c0_i32_1 = arith.constant 0 : i32
    return %arg0, %c0_i32, %c0_i32_0 : i32, i32, i32
  }
  func.func @transform_3(%arg0: i32) -> (i32, i32, i32) {
    %c0_i32 = arith.constant 0 : i32
    %c0_i32_0 = arith.constant 0 : i32
    %c0_i32_1 = arith.constant 0 : i32
    return %arg0, %c0_i32, %c0_i32_0 : i32, i32, i32
  }
  func.func @transform_4(%arg0: i32) -> (i32, i32, i32) {
    %c0_i32 = arith.constant 0 : i32
    %c0_i32_0 = arith.constant 0 : i32
    %c0_i32_1 = arith.constant 0 : i32
    return %arg0, %c0_i32, %c0_i32_0 : i32, i32, i32
  }
}

</mosaic_0001>

<llo_original>
// kernel: ssim_loss.1
$region0: #{ssim_loss.1}
  #allocation0 [shape = 'u32[]', space=smem, size = 0x4, offset = 0x4, fixed_abs, tag = 'smem constant byte address 0x4 - core index']
  #allocation1 [shape = 'u32[144,128]{1,0:T(1,128)}', space=vmem, size = 0x12000, scoped, tag = 'internal scratch']
  %s0 = inlined_call_operand.vmem [shape: f32[40,80], index: 0, kind: input, shape index: {}]
  %s1 = inlined_call_operand.vmem [shape: f32[128,128], index: 1, kind: input, shape index: {}]
  %s2 = inlined_call_operand.vmem [shape: f32[1,16,128], index: 2, kind: input, shape index: {}]
  %s3 = inlined_call_operand.vmem [shape: f32[1,16,128], index: 3, kind: input, shape index: {}]
  %s4 = inlined_call_operand.vmem [shape: f32[1,1,128], index: 4, kind: output, shape index: {}]
  %s5 = sld [smem:[#allocation0]]
  $region26: #{ssim_loss.1} parent=0
    _
  %s7 = ssub.s32 1, %s5
  %s8 = scalar_select 0, %s7, %s5
  // Predicated region
  $region2: #{ssim_loss.1} parent=0 // pred_check
    _
  $region3: #{ssim_loss.1} parent=0 // pred_check_branch
    %10 = sbr.rel (0) target = $region5
  $region4: #{ssim_loss.1} parent=0 // pred_region
    _
  $region5: #{ssim_loss.1} parent=0 // pred_fallthru
    _
  // Predicated region
  $region6: #{ssim_loss.1} parent=0 // pred_check
    _
  $region7: #{ssim_loss.1} parent=0 // pred_check_branch
    %12 = sbr.rel (0) target = $region9
  $region8: #{ssim_loss.1} parent=0 // pred_region
    _
  $region9: #{ssim_loss.1} parent=0 // pred_fallthru
    _
  // Predicated region
  $region10: #{ssim_loss.1} parent=0 // pred_check
    _
  $region11: #{ssim_loss.1} parent=0 // pred_check_branch
    %14 = sbr.rel (0) target = $region13
  $region12: #{ssim_loss.1} parent=0 // pred_region
    _
  $region13: #{ssim_loss.1} parent=0 // pred_fallthru
    _
  // Predicated region
  $region14: #{ssim_loss.1} parent=0 // pred_check
    _
  $region15: #{ssim_loss.1} parent=0 // pred_check_branch
    %16 = sbr.rel (0) target = $region17
  $region16: #{ssim_loss.1} parent=0 // pred_region
    _
  $region17: #{ssim_loss.1} parent=0 // pred_fallthru
    _
  %v17 = vld [vmem:[%s0] sm:$0xff]
  %v18 = vld [vmem:[%s0 + $0x8] sm:$0xff]
  %v19 = vld [vmem:[%s0 + $0x10] sm:$0xff]
  %v20 = vld [vmem:[%s0 + $0x18] sm:$0xff]
  %v21 = vld [vmem:[%s0 + $0x20] sm:$0xff]
  %v22 = vld [vmem:[%s1] sm:$0xff]
  %v23 = vld [vmem:[%s1 + $0x8] sm:$0xff]
  %v24 = vld [vmem:[%s1 + $0x10] sm:$0xff]
  %v25 = vld [vmem:[%s1 + $0x18] sm:$0xff]
  %v26 = vld [vmem:[%s1 + $0x20] sm:$0xff]
  %v27 = vld [vmem:[%s1 + $0x28] sm:$0xff]
  %v28 = vld [vmem:[%s1 + $0x30] sm:$0xff]
  %v29 = vld [vmem:[%s1 + $0x38] sm:$0xff]
  %v30 = vld [vmem:[%s1 + $0x40] sm:$0xff]
  %v31 = vld [vmem:[%s1 + $0x48] sm:$0xff]
  %v32 = vld [vmem:[%s1 + $0x50] sm:$0xff]
  %v33 = vld [vmem:[%s1 + $0x58] sm:$0xff]
  %v34 = vld [vmem:[%s1 + $0x60] sm:$0xff]
  %v35 = vld [vmem:[%s1 + $0x68] sm:$0xff]
  %v36 = vld [vmem:[%s1 + $0x70] sm:$0xff]
  %v37 = vld [vmem:[%s1 + $0x78] sm:$0xff]
  %v38 = vld [vmem:[%s2] sm:$0xff]
  %v39 = vld [vmem:[%s2 + $0x8] sm:$0xff]
  %v40 = vld [vmem:[%s3] sm:$0xff]
  %v41 = vld [vmem:[%s3 + $0x8] sm:$0xff]
  %v42 = vmul.f32 %v38, %v38
  %v43 = vmul.f32 %v39, %v39
  %v44 = vmul.f32 %v40, %v40
  %v45 = vmul.f32 %v41, %v41
  %v46 = vmul.f32 %v38, %v40
  %v47 = vmul.f32 %v39, %v41
  %48 = vmatprep.subr.mxu0 0.0
  %49 = vmatpush1.msra.mxu0 %v37
  %50 = vmatprep.subr.mxu0 0.0
  %51 = vmatpush1.msra.mxu0 %v36
  %52 = vmatprep.subr.mxu0 0.0
  %53 = vmatpush1.msra.mxu0 %v35
  %54 = vmatprep.subr.mxu0 0.0
  %55 = vmatpush1.msra.mxu0 %v34
  %56 = vmatprep.subr.mxu0 0.0
  %57 = vmatpush1.msra.mxu0 %v33
  %58 = vmatprep.subr.mxu0 0.0
  %59 = vmatpush1.msra.mxu0 %v32
  %60 = vmatprep.subr.mxu0 0.0
  %61 = vmatpush1.msra.mxu0 %v31
  %62 = vmatprep.subr.mxu0 0.0
  %63 = vmatpush1.msra.mxu0 %v30
  %64 = vmatprep.subr.mxu0 0.0
  %65 = vmatpush1.msra.mxu0 %v29
  %66 = vmatprep.subr.mxu0 0.0
  %67 = vmatpush1.msra.mxu0 %v28
  %68 = vmatprep.subr.mxu0 0.0
  %69 = vmatpush1.msra.mxu0 %v27
  %70 = vmatprep.subr.mxu0 0.0
  %71 = vmatpush1.msra.mxu0 %v26
  %72 = vmatprep.subr.mxu0 0.0
  %73 = vmatpush1.msra.mxu0 %v25
  %74 = vmatprep.subr.mxu0 0.0
  %75 = vmatpush1.msra.mxu0 %v24
  %76 = vmatprep.subr.mxu0 0.0
  %77 = vmatpush1.msra.mxu0 %v23
  %78 = vmatprep.subr.mxu0 0.0
  %79 = vmatpush1.msra.mxu0 %v22
  %80 = vmatprep.subr.mxu0 0.0
  %81 = vmatpush2.msra.mxu0 0.0
  %82 = vmatprep.subr.mxu0 0.0
  %83 = vmatpush2.msra.mxu0 0.0
  %84 = vmatprep.subr.mxu0 0.0
  %85 = vmatpush2.msra.mxu0 0.0
  %86 = vmatprep.subr.mxu0 0.0
  %87 = vmatpush2.msra.mxu0 0.0
  %88 = vmatprep.subr.mxu0 0.0
  %89 = vmatpush2.msra.mxu0 0.0
  %90 = vmatprep.subr.mxu0 0.0
  %91 = vmatpush2.msra.mxu0 0.0
  %92 = vmatprep.subr.mxu0 0.0
  %93 = vmatpush2.msra.mxu0 0.0
  %94 = vmatprep.subr.mxu0 0.0
  %95 = vmatpush2.msra.mxu0 0.0
  %96 = vmatprep.subr.mxu0 0.0
  %97 = vmatpush2.msra.mxu0 0.0
  %98 = vmatprep.subr.mxu0 0.0
  %99 = vmatpush2.msra.mxu0 0.0
  %100 = vmatprep.subr.mxu0 0.0
  %101 = vmatpush2.msra.mxu0 0.0
  %102 = vmatprep.subr.mxu0 0.0
  %103 = vmatpush2.msra.mxu0 0.0
  %104 = vmatprep.subr.mxu0 0.0
  %105 = vmatpush2.msra.mxu0 0.0
  %106 = vmatprep.subr.mxu0 0.0
  %107 = vmatpush2.msra.mxu0 0.0
  %108 = vmatprep.subr.mxu0 0.0
  %109 = vmatpush2.msra.mxu0 0.0
  %110 = vmatprep.subr.mxu0 0.0
  %111 = vmatpush2.msra.mxu0 0.0
  %112 = vmatprep.mubr.f32.mxu0 0.0
  %113 = vmatmul.mubr.f32.gmra.mxu0 %v38
  %v114 = vpop.f32.mrf.mxu0
  %v115 = vadd.f32 0.0, %v114
  %v116 = vpop.f32.mrf.mxu0
  %117 = vmatprep.mubr.f32.mxu0 0.0
  %118 = vmatmul.mubr.f32.gmra.mxu0 %v39
  %v119 = vpop.f32.mrf.mxu0
  %v120 = vadd.f32 0.0, %v119
  %v121 = vpop.f32.mrf.mxu0
  %122 = vmatprep.mubr.f32.mxu0 0.0
  %123 = vmatmul.mubr.f32.gmra.mxu0 %v40
  %v124 = vpop.f32.mrf.mxu0
  %v125 = vadd.f32 0.0, %v124
  %v126 = vpop.f32.mrf.mxu0
  %127 = vmatprep.mubr.f32.mxu0 0.0
  %128 = vmatmul.mubr.f32.gmra.mxu0 %v41
  %v129 = vpop.f32.mrf.mxu0
  %v130 = vadd.f32 0.0, %v129
  %v131 = vpop.f32.mrf.mxu0
  %132 = vmatprep.mubr.f32.mxu0 0.0
  %133 = vmatmul.mubr.f32.gmra.mxu0 %v42
  %v134 = vpop.f32.mrf.mxu0
  %v135 = vadd.f32 0.0, %v134
  %v136 = vpop.f32.mrf.mxu0
  %137 = vmatprep.mubr.f32.mxu0 0.0
  %138 = vmatmul.mubr.f32.gmra.mxu0 %v43
  %v139 = vpop.f32.mrf.mxu0
  %v140 = vadd.f32 0.0, %v139
  %v141 = vpop.f32.mrf.mxu0
  %142 = vmatprep.mubr.f32.mxu0 0.0
  %143 = vmatmul.mubr.f32.gmra.mxu0 %v44
  %v144 = vpop.f32.mrf.mxu0
  %v145 = vadd.f32 0.0, %v144
  %v146 = vpop.f32.mrf.mxu0
  %147 = vmatprep.mubr.f32.mxu0 0.0
  %148 = vmatmul.mubr.f32.gmra.mxu0 %v45
  %v149 = vpop.f32.mrf.mxu0
  %v150 = vadd.f32 0.0, %v149
  %v151 = vpop.f32.mrf.mxu0
  %152 = vmatprep.mubr.f32.mxu0 0.0
  %153 = vmatmul.mubr.f32.gmra.mxu0 %v46
  %v154 = vpop.f32.mrf.mxu0
  %v155 = vadd.f32 0.0, %v154
  %v156 = vpop.f32.mrf.mxu0
  %157 = vmatprep.mubr.f32.mxu0 0.0
  %158 = vmatmul.mubr.f32.gmra.mxu0 %v47
  %v159 = vpop.f32.mrf.mxu0
  %v160 = vadd.f32 0.0, %v159
  %v161 = vpop.f32.mrf.mxu0
  %162 = vdwg.mxu0
  %vm163 = vcmask 654336
  %v165 = vsel %vm163, %v17, 0
  %v168 = vsel %vm163, %v18, 0
  %v171 = vsel %vm163, %v19, 0
  %v174 = vsel %vm163, %v20, 0
  %v177 = vsel %vm163, %v21, 0
  %179 = vmatprep.subr.mxu0 0.0
  %180 = vmatpush1.msra.mxu0 0.0
  %181 = vmatprep.subr.mxu0 0.0
  %182 = vmatpush1.msra.mxu0 0.0
  %183 = vmatprep.subr.mxu0 0.0
  %184 = vmatpush1.msra.mxu0 0.0
  %185 = vmatprep.subr.mxu0 0.0
  %186 = vmatpush1.msra.mxu0 0.0
  %187 = vmatprep.subr.mxu0 0.0
  %188 = vmatpush1.msra.mxu0 0.0
  %189 = vmatprep.subr.mxu0 0.0
  %190 = vmatpush1.msra.mxu0 0.0
  %191 = vmatprep.subr.mxu0 0.0
  %192 = vmatpush1.msra.mxu0 %v160
  %193 = vmatprep.subr.mxu0 0.0
  %194 = vmatpush1.msra.mxu0 %v155
  %195 = vmatprep.subr.mxu0 0.0
  %196 = vmatpush1.msra.mxu0 %v150
  %197 = vmatprep.subr.mxu0 0.0
  %198 = vmatpush1.msra.mxu0 %v145
  %199 = vmatprep.subr.mxu0 0.0
  %200 = vmatpush1.msra.mxu0 %v140
  %201 = vmatprep.subr.mxu0 0.0
  %202 = vmatpush1.msra.mxu0 %v135
  %203 = vmatprep.subr.mxu0 0.0
  %204 = vmatpush1.msra.mxu0 %v130
  %205 = vmatprep.subr.mxu0 0.0
  %206 = vmatpush1.msra.mxu0 %v125
  %207 = vmatprep.subr.mxu0 0.0
  %208 = vmatpush1.msra.mxu0 %v120
  %209 = vmatprep.subr.mxu0 0.0
  %210 = vmatpush1.msra.mxu0 %v115
  %211 = vmatprep.subr.mxu0 0.0
  %212 = vmatpush2.msra.mxu0 0.0
  %213 = vmatprep.subr.mxu0 0.0
  %214 = vmatpush2.msra.mxu0 0.0
  %215 = vmatprep.subr.mxu0 0.0
  %216 = vmatpush2.msra.mxu0 0.0
  %217 = vmatprep.subr.mxu0 0.0
  %218 = vmatpush2.msra.mxu0 0.0
  %219 = vmatprep.subr.mxu0 0.0
  %220 = vmatpush2.msra.mxu0 0.0
  %221 = vmatprep.subr.mxu0 0.0
  %222 = vmatpush2.msra.mxu0 0.0
  %223 = vmatprep.subr.mxu0 0.0
  %224 = vmatpush2.msra.mxu0 0.0
  %225 = vmatprep.subr.mxu0 0.0
  %226 = vmatpush2.msra.mxu0 0.0
  %227 = vmatprep.subr.mxu0 0.0
  %228 = vmatpush2.msra.mxu0 0.0
  %229 = vmatprep.subr.mxu0 0.0
  %230 = vmatpush2.msra.mxu0 0.0
  %231 = vmatprep.subr.mxu0 0.0
  %232 = vmatpush2.msra.mxu0 0.0
  %233 = vmatprep.subr.mxu0 0.0
  %234 = vmatpush2.msra.mxu0 0.0
  %235 = vmatprep.subr.mxu0 0.0
  %236 = vmatpush2.msra.mxu0 0.0
  %237 = vmatprep.subr.mxu0 0.0
  %238 = vmatpush2.msra.mxu0 0.0
  %239 = vmatprep.subr.mxu0 0.0
  %240 = vmatpush2.msra.mxu0 0.0
  %241 = vmatprep.subr.mxu0 0.0
  %242 = vmatpush2.msra.mxu0 0.0
  %243 = vmatprep.mubr.f32.mxu0 0.0
  %244 = vmatmul.mubr.f32.gmra.mxu0 %v165
  %v245 = vpop.f32.mrf.mxu0
  %v246 = vadd.f32 0.0, %v245
  %v247 = vpop.f32.mrf.mxu0
  %248 = vmatprep.mubr.f32.mxu0 0.0
  %249 = vmatmul.mubr.f32.gmra.mxu0 %v168
  %v250 = vpop.f32.mrf.mxu0
  %v251 = vadd.f32 0.0, %v250
  %v252 = vpop.f32.mrf.mxu0
  %253 = vmatprep.mubr.f32.mxu0 0.0
  %254 = vmatmul.mubr.f32.gmra.mxu0 %v171
  %v255 = vpop.f32.mrf.mxu0
  %v256 = vadd.f32 0.0, %v255
  %v257 = vpop.f32.mrf.mxu0
  %258 = vmatprep.mubr.f32.mxu0 0.0
  %259 = vmatmul.mubr.f32.gmra.mxu0 %v174
  %v260 = vpop.f32.mrf.mxu0
  %v261 = vadd.f32 0.0, %v260
  %v262 = vpop.f32.mrf.mxu0
  %263 = vmatprep.mubr.f32.mxu0 0.0
  %264 = vmatmul.mubr.f32.gmra.mxu0 %v177
  %v265 = vpop.f32.mrf.mxu0
  %v266 = vadd.f32 0.0, %v265
  %v267 = vpop.f32.mrf.mxu0
  %268 = vdwg.mxu0
  %v269 = vmul.f32 %v246, %v251
  %v270 = vmul.f32 %v246, %v246
  %v271 = vmul.f32 %v251, %v251
  %v272 = vadd.f32 %v270, %v271
  %v273 = vsub.f32 %v266, %v269
  %v274 = vadd.f32 %v256, %v261
  %v275 = vsub.f32 %v274, %v272
  %v276 = vmul.f32 %v269, 2.0
  %v277 = vadd.f32 %v276, 0.0001
  %v278 = vmul.f32 %v273, 2.0
  %v279 = vadd.f32 %v278, 0.0009
  %v280 = vmul.f32 %v277, %v279
  %v281 = vadd.f32 %v272, 0.0001
  %v282 = vadd.f32 %v275, 0.0009
  %v283 = vmul.f32 %v281, %v282
  %v284 = vrcp.pop %v283
  %v285 = vmul.f32 %v283, %v284
  %v286 = vsub.f32 2.0, %v285
  %v287 = vmul.f32 %v284, %v286
  %v288 = vsub.f32 %v280, %v283
  %v289 = vmul.f32 %v288, %v287
  %290 = vadd.xlane.f32.xlu0 %v289
  %v291 = vpop.xlane.xlu0 %290
  %v292 = vrot.slane %v291, 4
  %v293 = vadd.f32 %v291, %v292
  %v294 = vrot.slane %v293, 2
  %v295 = vadd.f32 %v293, %v294
  %v296 = vrot.slane %v295, 1
  %v297 = vadd.f32 %v295, %v296
  %s298 = vtos %v297
  %v299 = vstv %s298
  %300 = vst [vmem:[%s4] sm:$0x1] %v299
  // Predicated region
  $region18: #{ssim_loss.1} parent=0 // pred_check
    _
  $region19: #{ssim_loss.1} parent=0 // pred_check_branch
    %302 = sbr.rel (0) target = $region21
  $region20: #{ssim_loss.1} parent=0 // pred_region
    _
  $region21: #{ssim_loss.1} parent=0 // pred_fallthru
    _
  // Predicated region
  $region22: #{ssim_loss.1} parent=0 // pred_check
    _
  $region23: #{ssim_loss.1} parent=0 // pred_check_branch
    %304 = sbr.rel (0) target = $region25
  $region24: #{ssim_loss.1} parent=0 // pred_region
    _
  $region25: #{ssim_loss.1} parent=0 // pred_fallthru
    _

</llo_original>
